<compile_context>
chip_gen: v7x
topology: tpu7x:2x2x1
jax: 0.10.0
libtpu: 0.0.40
codegen_flags: <defaults>
</compile_context>

<pallas_src>
import jax
import jax.numpy as jnp
from jax.experimental import pallas as pl
from jax.experimental.pallas import tpu as pltpu


def _round_up(x, m):
    return (x + m - 1) // m * m


# --------------------------------------------------------------------------- #
# Pallas kernel: single bipolar matmul + per-channel threshold (FSUAdd bit)    #
# --------------------------------------------------------------------------- #
def _fsu_conv_kernel(x_ref, wt_ref, thr_ref, o_ref):
    # x_ref  : (tn, CKKp)  bf16 unary patch bits (0/1), CKK padded with zeros
    # wt_ref : (CKKp, to)  bf16 pre-transposed bipolar weights 2*w_bit-1 (pad cols = 0)
    # thr_ref: (1,  to)    f32 per-channel threshold = scale - CKK + rowsum(W) - bias_bit
    acc = jnp.dot(x_ref[...], wt_ref[...], preferred_element_type=jnp.float32)
    o_ref[...] = (acc >= thr_ref[...]).astype(o_ref.dtype)


# --------------------------------------------------------------------------- #
# Wrapper                                                                      #
# --------------------------------------------------------------------------- #
def fsu_conv2d(x, weight, bias, *, stride=1, padding=1, dilation=1,
               bitwidth=8, tn=512, to=256):
    """x: (B, C, H, W) unary bit-stream input (0/1 floats), NCHW.
       weight: (O, C, KH, KW) binary weights in [-1, 1] (bipolar).
       bias:   (O,)           binary bias    in [-1, 1] (bipolar)."""
    B, C, H, W = x.shape
    O, _, KH, KW = weight.shape
    OH = (H + 2 * padding - dilation * (KH - 1) - 1) // stride + 1
    OW = (W + 2 * padding - dilation * (KW - 1) - 1) // stride + 1
    CKK = C * KH * KW

    # ---- bit-stream generation (SourceGen + Sobol RNG + BSGen stand-in) ---- #
    lvl = float(2 ** bitwidth)
    rng0 = 0.0                                    # first point of the 1-D Sobol sequence
    w_source = jnp.round((weight.astype(jnp.float32) + 1.0) / 2.0 * lvl)
    w_bits = (w_source > rng0).astype(jnp.float32).reshape(O, CKK)
    b_source = jnp.round((bias.astype(jnp.float32) + 1.0) / 2.0 * lvl)
    b_bits = (b_source > rng0).astype(jnp.float32)                      # (O,)

    # FSUAdd scale: math.prod(kernel_size) * in_channels + bias(=True)
    scale = float(KH * KW * C + 1)

    # Fold the whole bipolar PC + bias + FSUAdd compare into weights/threshold:
    #   pc = 2*(X@W^T) + CKK - rowsum(X) - rowsum(W) + b
    #   pc >= scale  <=>  X @ (2W-1)^T >= scale - CKK + rowsum(W) - b
    w_bip = 2.0 * w_bits - 1.0                                          # (O, CKK) in {-1,+1}
    thr = scale - float(CKK) + jnp.sum(w_bits, axis=1) - b_bits         # (O,) f32

    # ---- pad O / CKK to lane & MXU friendly multiples of 128 --------------- #
    CKKp = _round_up(CKK, 128)
    Op = _round_up(O, 128)
    wt = jnp.zeros((CKKp, Op), jnp.bfloat16).at[:CKK, :O].set(
        w_bip.T.astype(jnp.bfloat16))                                   # pad cols/rows = 0
    thr_p = jnp.full((1, Op), 1e30, jnp.float32).at[0, :O].set(thr)     # pad chans never fire

    # ---- im2col (torch.nn.functional.unfold, ordering c-major then kh,kw) -- #
    # TODO(synk): replace with in-kernel patch build from raw NHWC tiles to avoid the
    #             KH*KW HBM read inflation of the materialized patch matrix.
    xb = x.astype(jnp.bfloat16)
    xp = jnp.pad(xb, ((0, 0), (0, 0), (padding, padding), (padding, padding)))
    cols = []
    for i in range(KH):
        for j in range(KW):
            cols.append(xp[:, :,
                           i * dilation: i * dilation + (OH - 1) * stride + 1: stride,
                           j * dilation: j * dilation + (OW - 1) * stride + 1: stride])
    patches = jnp.stack(cols, axis=2).reshape(B, CKK, OH * OW)          # (B, C*KH*KW, L)
    xcol = patches.transpose(0, 2, 1).reshape(B * OH * OW, CKK)         # (N, CKK) bf16

    N = xcol.shape[0]
    tn = max(8, min(tn, _round_up(N, 8)))          # multiple of 8, no gratuitous padding
    Np = pl.cdiv(N, tn) * tn
    to = min(to, Op)
    if Op % to:
        to = 128                                    # Op is always a multiple of 128
    xcol_p = jnp.pad(xcol, ((0, Np - N), (0, CKKp - CKK)))

    grid = (Np // tn, Op // to)

    # advisory cost for XLA scheduling of the surrounding im2col / reshape glue
    cost = pl.CostEstimate(
        flops=2 * Np * Op * CKKp,
        transcendentals=0,
        bytes_accessed=Np * CKKp * 2 + CKKp * Op * 2 + Np * Op * 2 + Op * 4)

    # double-buffered bf16 blocks (+ thr) with headroom; fits v7x's 64 MiB budget
    vmem_need = 2 * 2 * (tn * CKKp + CKKp * to + tn * to) + 2 * 4 * to
    vmem_limit = int(min(max(4 * vmem_need, 16 * 2 ** 20), 48 * 2 ** 20))

    out = pl.pallas_call(
        _fsu_conv_kernel,
        out_shape=jax.ShapeDtypeStruct((Np, Op), jnp.bfloat16),
        grid_spec=pltpu.PrefetchScalarGridSpec(
            num_scalar_prefetch=0,
            grid=grid,
            in_specs=[
                pl.BlockSpec((tn, CKKp), lambda i, j: (i, 0)),   # patch rows, tiled over N
                pl.BlockSpec((CKKp, to), lambda i, j: (0, j)),   # pre-transposed weights
                pl.BlockSpec((1, to), lambda i, j: (0, j)),      # per-channel thresholds
            ],
            out_specs=pl.BlockSpec((tn, to), lambda i, j: (i, j)),
        ),
        compiler_params=pltpu.CompilerParams(
            dimension_semantics=("parallel", "parallel"),
            vmem_limit_bytes=vmem_limit),
        cost_estimate=cost,
    )(xcol_p, wt, thr_p)

    out = out[:N, :O].astype(jnp.float32)
    out = out.reshape(B, OH * OW, O).transpose(0, 2, 1).reshape(B, O, OH, OW)
    return out


# --------------------------------------------------------------------------- #
# Pure-JAX reference (original two-matmul form, f32) for a sanity check        #
# --------------------------------------------------------------------------- #
def _reference(x, weight, bias, *, stride=1, padding=1, dilation=1, bitwidth=8):
    B, C, H, W = x.shape
    O, _, KH, KW = weight.shape
    OH = (H + 2 * padding - dilation * (KH - 1) - 1) // stride + 1
    OW = (W + 2 * padding - dilation * (KW - 1) - 1) // stride + 1
    CKK = C * KH * KW
    lvl = float(2 ** bitwidth)
    w_bits = (jnp.round((weight + 1.0) / 2.0 * lvl) > 0.0).astype(jnp.float32).reshape(O, CKK)
    b_bits = (jnp.round((bias + 1.0) / 2.0 * lvl) > 0.0).astype(jnp.float32)
    xp = jnp.pad(x, ((0, 0), (0, 0), (padding, padding), (padding, padding)))
    cols = []
    for i in range(KH):
        for j in range(KW):
            cols.append(xp[:, :,
                           i * dilation: i * dilation + (OH - 1) * stride + 1: stride,
                           j * dilation: j * dilation + (OW - 1) * stride + 1: stride])
    patches = jnp.stack(cols, axis=2).reshape(B, CKK, OH * OW)
    xcol = patches.transpose(0, 2, 1).reshape(B * OH * OW, CKK)
    pc = xcol @ w_bits.T + (1.0 - xcol) @ (1.0 - w_bits).T + b_bits[None, :]
    scale = float(KH * KW * C + 1)
    out = (pc >= scale).astype(jnp.float32)
    return out.reshape(B, OH * OW, O).transpose(0, 2, 1).reshape(B, O, OH, OW)


if __name__ == "__main__":
    B, C_in, C_out, H, W, K = 2, 4, 8, 16, 16, 3

    key = jax.random.PRNGKey(0)
    kx, kw, kb = jax.random.split(key, 3)
    # unary (bit-stream) input: 0/1 values
    x = jax.random.bernoulli(kx, 0.5, (B, C_in, H, W)).astype(jnp.float32)
    # bipolar binary weights / bias in [-1, 1]
    weight = jax.random.uniform(kw, (C_out, C_in, K, K), jnp.float32, -1.0, 1.0)
    bias = jax.random.uniform(kb, (C_out,), jnp.float32, -1.0, 1.0)

    out = fsu_conv2d(x, weight, bias, stride=1, padding=1, dilation=1, bitwidth=8)
    out = jax.block_until_ready(out)

    ref = _reference(x, weight, bias, stride=1, padding=1, dilation=1, bitwidth=8)
    assert out.shape == (B, C_out, H, W), out.shape
    assert jnp.allclose(out, ref), "mismatch vs reference"

    print("KERNEL_OK")
</pallas_src>

<mosaic_0001>
module attributes {stable_mosaic.version = 11 : i64} {
  func.func @_fsu_conv_kernel(%arg0: i32, %arg1: i32, %arg2: memref<512x128xbf16, #tpu.memory_space<vmem>>, %arg3: memref<128x128xbf16, #tpu.memory_space<vmem>>, %arg4: memref<1x128xf32, #tpu.memory_space<vmem>>, %arg5: memref<512x128xbf16, #tpu.memory_space<vmem>>) attributes {dimension_semantics = [#tpu.dimension_semantics<parallel>, #tpu.dimension_semantics<parallel>], iteration_bounds = array<i64: 1, 1>, scalar_prefetch = 0 : i64, scratch_operands = 0 : i64, tpu.core_type = #tpu.core_type<tc>, window_params = [{transform_indices = @transform_0, window_bounds = array<i64: 512, 128>}, {transform_indices = @transform_1, window_bounds = array<i64: 128, 128>}, {transform_indices = @transform_2, window_bounds = array<i64: 1, 128>}, {transform_indices = @transform_3, window_bounds = array<i64: 512, 128>}]} {
    %c0 = arith.constant 0 : index
    %c0_0 = arith.constant 0 : index
    %0 = vector.load %arg2[%c0, %c0_0] : memref<512x128xbf16, #tpu.memory_space<vmem>>, vector<512x128xbf16>
    %c0_1 = arith.constant 0 : index
    %c0_2 = arith.constant 0 : index
    %1 = vector.load %arg3[%c0_1, %c0_2] : memref<128x128xbf16, #tpu.memory_space<vmem>>, vector<128x128xbf16>
    %cst = arith.constant dense<0.000000e+00> : vector<512x128xf32>
    %2 = tpu.matmul %0, %1, %cst {dimension_numbers = #tpu.dot_dimension_numbers<[1], [0], [0], [1], [0, 0, 1, 1], [], []>} : vector<512x128xbf16>, vector<128x128xbf16>, vector<512x128xf32> -> vector<512x128xf32>
    %c0_3 = arith.constant 0 : index
    %c0_4 = arith.constant 0 : index
    %3 = vector.load %arg4[%c0_3, %c0_4] : memref<1x128xf32, #tpu.memory_space<vmem>>, vector<1x128xf32>
    %4 = vector.broadcast %3 : vector<1x128xf32> to vector<512x128xf32>
    %5 = arith.cmpf oge, %2, %4 : vector<512x128xf32>
    %6 = arith.extui %5 : vector<512x128xi1> to vector<512x128xi32>
    %7 = arith.sitofp %6 : vector<512x128xi32> to vector<512x128xf32>
    %8 = arith.truncf %7 : vector<512x128xf32> to vector<512x128xbf16>
    %c0_5 = arith.constant 0 : index
    %c0_6 = arith.constant 0 : index
    %9 = vector.load %arg5[%c0_5, %c0_6] : memref<512x128xbf16, #tpu.memory_space<vmem>>, vector<512x128xbf16>
    tpu.vector_store %arg5[%c0_5, %c0_6], %8 {strides = array<i32>} : memref<512x128xbf16, #tpu.memory_space<vmem>>, vector<512x128xbf16>,
    return
  }
  func.func @transform_0(%arg0: i32, %arg1: i32) -> (i32, i32) {
    %c0_i32 = arith.constant 0 : i32
    %c0_i32_0 = arith.constant 0 : i32
    return %arg0, %c0_i32 : i32, i32
  }
  func.func @transform_1(%arg0: i32, %arg1: i32) -> (i32, i32) {
    %c0_i32 = arith.constant 0 : i32
    %c0_i32_0 = arith.constant 0 : i32
    return %c0_i32, %arg1 : i32, i32
  }
  func.func @transform_2(%arg0: i32, %arg1: i32) -> (i32, i32) {
    %c0_i32 = arith.constant 0 : i32
    %c0_i32_0 = arith.constant 0 : i32
    return %c0_i32, %arg1 : i32, i32
  }
  func.func @transform_3(%arg0: i32, %arg1: i32) -> (i32, i32) {
    %c0_i32 = arith.constant 0 : i32
    return %arg0, %arg1 : i32, i32
  }
}

</mosaic_0001>

<llo_original>
// kernel: tpu_custom_call.1
$region0: #{tpu_custom_call.1}
  #allocation0 [shape = 'u32[]', space=smem, size = 0x4, offset = 0x4, fixed_abs, tag = 'smem constant byte address 0x4 - core index']
  #allocation1 [shape = 'u32[144,128]{1,0:T(1,128)}', space=vmem, size = 0x12000, scoped, tag = 'internal scratch']
  %s0 = inlined_call_operand.hbm [shape: bf16[512,128], index: 0, kind: input, shape index: {}]
  %s1 = inlined_call_operand.hbm [shape: bf16[128,128], index: 1, kind: input, shape index: {}]
  %s2 = inlined_call_operand.vmem [shape: f32[1,128], index: 2, kind: input, shape index: {}]
  %s3 = inlined_call_operand.hbm [shape: bf16[512,128], index: 3, kind: output, shape index: {}]
  %s4 = sld [smem:[#allocation0]]
  $region30: #{tpu_custom_call.1} parent=0
    _
  %s6 = ssub.s32 1, %s4
  %s7 = scalar_select 0, %s6, %s4
  $region1: #{tpu_custom_call.1} parent=0
    #allocation2 [shape = 'u8[131072]{0}', space=vmem, size = 0x20000, scoped, tag = 'input window, operand 0, single buffered']
    #allocation3 [shape = 's32[1]{0}', space=sflag, size = 0x4, scoped, tag = 'scoped memory for tpu_custom_call.1']
    #allocation4 [shape = 's32[1]{0}', space=sflag, size = 0x4, scoped, tag = 'scoped memory for tpu_custom_call.1']
    #allocation5 [shape = 'u8[32768]{0}', space=vmem, size = 0x8000, scoped, tag = 'input window, operand 1, single buffered']
    #allocation6 [shape = 's32[1]{0}', space=sflag, size = 0x4, scoped, tag = 'scoped memory for tpu_custom_call.1']
    #allocation7 [shape = 'u8[131072]{0}', space=vmem, size = 0x20000, scoped, tag = 'output window, operand 0, single buffered']
    %8 = vsyncpa [#allocation3], 0
    %9 = vsyncpa [#allocation6], 0
    %10 = vsyncpa [#allocation4], 0
    // Predicated region
    $region2: #{tpu_custom_call.1} parent=1 // pred_check
      _
    $region3: #{tpu_custom_call.1} parent=1 // pred_check_branch
      %12 = sbr.rel (0) target = $region5
    $region4: #{tpu_custom_call.1} parent=1 // pred_region
      %s14 = ssub.s32 4096, 4096
      %15 = vsyncadd [#allocation3], %s14
      %s16 = sshll.u32 [#allocation2], 4
      %s17 = int_to_ptr.vmem [resolvable:$true] %s16
      %22 = dma.hbm_to_vmem [thread:$0]  %s0, 4096, %s17, [#allocation3], 64, 64, 4
    $region5: #{tpu_custom_call.1} parent=1 // pred_fallthru
      _
    // Predicated region
    $region6: #{tpu_custom_call.1} parent=1 // pred_check
      _
    $region7: #{tpu_custom_call.1} parent=1 // pred_check_branch
      %24 = sbr.rel (0) target = $region9
    $region8: #{tpu_custom_call.1} parent=1 // pred_region
      %s26 = ssub.s32 1024, 1024
      %27 = vsyncadd [#allocation6], %s26
      %s28 = sshll.u32 [#allocation5], 4
      %s29 = int_to_ptr.vmem [resolvable:$true] %s28
      %34 = dma.hbm_to_vmem [thread:$0]  %s1, 1024, %s29, [#allocation6], 64, 64, 4
    $region9: #{tpu_custom_call.1} parent=1 // pred_fallthru
      _
    // Predicated region
    $region10: #{tpu_custom_call.1} parent=1 // pred_check
      _
    $region11: #{tpu_custom_call.1} parent=1 // pred_check_branch
      %36 = sbr.rel (0) target = $region13
    $region12: #{tpu_custom_call.1} parent=1 // pred_region
      _
    $region13: #{tpu_custom_call.1} parent=1 // pred_fallthru
      _
    // Predicated region
    $region14: #{tpu_custom_call.1} parent=1 // pred_check
      _
    $region15: #{tpu_custom_call.1} parent=1 // pred_check_branch
      %38 = sbr.rel (0) target = $region17
    $region16: #{tpu_custom_call.1} parent=1 // pred_region
      %39 = dma.done [#allocation3], 4096
    $region17: #{tpu_custom_call.1} parent=1 // pred_fallthru
      _
    // Predicated region
    $region18: #{tpu_custom_call.1} parent=1 // pred_check
      _
    $region19: #{tpu_custom_call.1} parent=1 // pred_check_branch
      %41 = sbr.rel (0) target = $region21
    $region20: #{tpu_custom_call.1} parent=1 // pred_region
      %42 = dma.done [#allocation6], 1024
    $region21: #{tpu_custom_call.1} parent=1 // pred_fallthru
      _
    %v44 = vld [vmem:[#allocation2] sm:$0xf]
    %v45 = vld [vmem:[#allocation2 + $0x4] sm:$0xf]
    %v46 = vld [vmem:[#allocation2 + $0x8] sm:$0xf]
    %v47 = vld [vmem:[#allocation2 + $0xc] sm:$0xf]
    %v48 = vld [vmem:[#allocation2 + $0x10] sm:$0xf]
    %v49 = vld [vmem:[#allocation2 + $0x14] sm:$0xf]
    %v50 = vld [vmem:[#allocation2 + $0x18] sm:$0xf]
    %v51 = vld [vmem:[#allocation2 + $0x1c] sm:$0xf]
    %v52 = vld [vmem:[#allocation2 + $0x20] sm:$0xf]
    %v53 = vld [vmem:[#allocation2 + $0x24] sm:$0xf]
    %v54 = vld [vmem:[#allocation2 + $0x28] sm:$0xf]
    %v55 = vld [vmem:[#allocation2 + $0x2c] sm:$0xf]
    %v56 = vld [vmem:[#allocation2 + $0x30] sm:$0xf]
    %v57 = vld [vmem:[#allocation2 + $0x34] sm:$0xf]
    %v58 = vld [vmem:[#allocation2 + $0x38] sm:$0xf]
    %v59 = vld [vmem:[#allocation2 + $0x3c] sm:$0xf]
    %v60 = vld [vmem:[#allocation2 + $0x40] sm:$0xf]
    %v61 = vld [vmem:[#allocation2 + $0x44] sm:$0xf]
    %v62 = vld [vmem:[#allocation2 + $0x48] sm:$0xf]
    %v63 = vld [vmem:[#allocation2 + $0x4c] sm:$0xf]
    %v64 = vld [vmem:[#allocation2 + $0x50] sm:$0xf]
    %v65 = vld [vmem:[#allocation2 + $0x54] sm:$0xf]
    %v66 = vld [vmem:[#allocation2 + $0x58] sm:$0xf]
    %v67 = vld [vmem:[#allocation2 + $0x5c] sm:$0xf]
    %v68 = vld [vmem:[#allocation2 + $0x60] sm:$0xf]
    %v69 = vld [vmem:[#allocation2 + $0x64] sm:$0xf]
    %v70 = vld [vmem:[#allocation2 + $0x68] sm:$0xf]
    %v71 = vld [vmem:[#allocation2 + $0x6c] sm:$0xf]
    %v72 = vld [vmem:[#allocation2 + $0x70] sm:$0xf]
    %v73 = vld [vmem:[#allocation2 + $0x74] sm:$0xf]
    %v74 = vld [vmem:[#allocation2 + $0x78] sm:$0xf]
    %v75 = vld [vmem:[#allocation2 + $0x7c] sm:$0xf]
    %v76 = vld [vmem:[#allocation2 + $0x80] sm:$0xf]
    %v77 = vld [vmem:[#allocation2 + $0x84] sm:$0xf]
    %v78 = vld [vmem:[#allocation2 + $0x88] sm:$0xf]
    %v79 = vld [vmem:[#allocation2 + $0x8c] sm:$0xf]
    %v80 = vld [vmem:[#allocation2 + $0x90] sm:$0xf]
    %v81 = vld [vmem:[#allocation2 + $0x94] sm:$0xf]
    %v82 = vld [vmem:[#allocation2 + $0x98] sm:$0xf]
    %v83 = vld [vmem:[#allocation2 + $0x9c] sm:$0xf]
    %v84 = vld [vmem:[#allocation2 + $0xa0] sm:$0xf]
    %v85 = vld [vmem:[#allocation2 + $0xa4] sm:$0xf]
    %v86 = vld [vmem:[#allocation2 + $0xa8] sm:$0xf]
    %v87 = vld [vmem:[#allocation2 + $0xac] sm:$0xf]
    %v88 = vld [vmem:[#allocation2 + $0xb0] sm:$0xf]
    %v89 = vld [vmem:[#allocation2 + $0xb4] sm:$0xf]
    %v90 = vld [vmem:[#allocation2 + $0xb8] sm:$0xf]
    %v91 = vld [vmem:[#allocation2 + $0xbc] sm:$0xf]
    %v92 = vld [vmem:[#allocation2 + $0xc0] sm:$0xf]
    %v93 = vld [vmem:[#allocation2 + $0xc4] sm:$0xf]
    %v94 = vld [vmem:[#allocation2 + $0xc8] sm:$0xf]
    %v95 = vld [vmem:[#allocation2 + $0xcc] sm:$0xf]
    %v96 = vld [vmem:[#allocation2 + $0xd0] sm:$0xf]
    %v97 = vld [vmem:[#allocation2 + $0xd4] sm:$0xf]
    %v98 = vld [vmem:[#allocation2 + $0xd8] sm:$0xf]
    %v99 = vld [vmem:[#allocation2 + $0xdc] sm:$0xf]
    %v100 = vld [vmem:[#allocation2 + $0xe0] sm:$0xf]
    %v101 = vld [vmem:[#allocation2 + $0xe4] sm:$0xf]
    %v102 = vld [vmem:[#allocation2 + $0xe8] sm:$0xf]
    %v103 = vld [vmem:[#allocation2 + $0xec] sm:$0xf]
    %v104 = vld [vmem:[#allocation2 + $0xf0] sm:$0xf]
    %v105 = vld [vmem:[#allocation2 + $0xf4] sm:$0xf]
    %v106 = vld [vmem:[#allocation2 + $0xf8] sm:$0xf]
    %v107 = vld [vmem:[#allocation2 + $0xfc] sm:$0xf]
    %v108 = vld [vmem:[#allocation5] sm:$0xf]
    %v109 = vld [vmem:[#allocation5 + $0x4] sm:$0xf]
    %v110 = vld [vmem:[#allocation5 + $0x8] sm:$0xf]
    %v111 = vld [vmem:[#allocation5 + $0xc] sm:$0xf]
    %v112 = vld [vmem:[#allocation5 + $0x10] sm:$0xf]
    %v113 = vld [vmem:[#allocation5 + $0x14] sm:$0xf]
    %v114 = vld [vmem:[#allocation5 + $0x18] sm:$0xf]
    %v115 = vld [vmem:[#allocation5 + $0x1c] sm:$0xf]
    %v116 = vld [vmem:[#allocation5 + $0x20] sm:$0xf]
    %v117 = vld [vmem:[#allocation5 + $0x24] sm:$0xf]
    %v118 = vld [vmem:[#allocation5 + $0x28] sm:$0xf]
    %v119 = vld [vmem:[#allocation5 + $0x2c] sm:$0xf]
    %v120 = vld [vmem:[#allocation5 + $0x30] sm:$0xf]
    %v121 = vld [vmem:[#allocation5 + $0x34] sm:$0xf]
    %v122 = vld [vmem:[#allocation5 + $0x38] sm:$0xf]
    %v123 = vld [vmem:[#allocation5 + $0x3c] sm:$0xf]
    %v188 = vunpack.c.l.b16 %v44
    %v189 = vunpack.c.l.b16 %v45
    %v190 = vunpack.c.l.b16 %v46
    %v191 = vunpack.c.l.b16 %v47
    %v192 = vunpack.c.l.b16 %v48
    %v193 = vunpack.c.l.b16 %v49
    %v194 = vunpack.c.l.b16 %v50
    %v195 = vunpack.c.l.b16 %v51
    %v196 = vunpack.c.l.b16 %v52
    %v197 = vunpack.c.l.b16 %v53
    %v198 = vunpack.c.l.b16 %v54
    %v199 = vunpack.c.l.b16 %v55
    %v200 = vunpack.c.l.b16 %v56
    %v201 = vunpack.c.l.b16 %v57
    %v202 = vunpack.c.l.b16 %v58
    %v203 = vunpack.c.l.b16 %v59
    %v204 = vunpack.c.l.b16 %v60
    %v205 = vunpack.c.l.b16 %v61
    %v206 = vunpack.c.l.b16 %v62
    %v207 = vunpack.c.l.b16 %v63
    %v208 = vunpack.c.l.b16 %v64
    %v209 = vunpack.c.l.b16 %v65
    %v210 = vunpack.c.l.b16 %v66
    %v211 = vunpack.c.l.b16 %v67
    %v212 = vunpack.c.l.b16 %v68
    %v213 = vunpack.c.l.b16 %v69
    %v214 = vunpack.c.l.b16 %v70
    %v215 = vunpack.c.l.b16 %v71
    %v216 = vunpack.c.l.b16 %v72
    %v217 = vunpack.c.l.b16 %v73
    %v218 = vunpack.c.l.b16 %v74
    %v219 = vunpack.c.l.b16 %v75
    %v220 = vunpack.c.l.b16 %v76
    %v221 = vunpack.c.l.b16 %v77
    %v222 = vunpack.c.l.b16 %v78
    %v223 = vunpack.c.l.b16 %v79
    %v224 = vunpack.c.l.b16 %v80
    %v225 = vunpack.c.l.b16 %v81
    %v226 = vunpack.c.l.b16 %v82
    %v227 = vunpack.c.l.b16 %v83
    %v228 = vunpack.c.l.b16 %v84
    %v229 = vunpack.c.l.b16 %v85
    %v230 = vunpack.c.l.b16 %v86
    %v231 = vunpack.c.l.b16 %v87
    %v232 = vunpack.c.l.b16 %v88
    %v233 = vunpack.c.l.b16 %v89
    %v234 = vunpack.c.l.b16 %v90
    %v235 = vunpack.c.l.b16 %v91
    %v236 = vunpack.c.l.b16 %v92
    %v237 = vunpack.c.l.b16 %v93
    %v238 = vunpack.c.l.b16 %v94
    %v239 = vunpack.c.l.b16 %v95
    %v240 = vunpack.c.l.b16 %v96
    %v241 = vunpack.c.l.b16 %v97
    %v242 = vunpack.c.l.b16 %v98
    %v243 = vunpack.c.l.b16 %v99
    %v244 = vunpack.c.l.b16 %v100
    %v245 = vunpack.c.l.b16 %v101
    %v246 = vunpack.c.l.b16 %v102
    %v247 = vunpack.c.l.b16 %v103
    %v248 = vunpack.c.l.b16 %v104
    %v249 = vunpack.c.l.b16 %v105
    %v250 = vunpack.c.l.b16 %v106
    %v251 = vunpack.c.l.b16 %v107
    %v252 = vpack.c.b16 %v189, %v188
    %v253 = vpack.c.b16 %v191, %v190
    %v254 = vpack.c.b16 %v193, %v192
    %v255 = vpack.c.b16 %v195, %v194
    %v256 = vpack.c.b16 %v197, %v196
    %v257 = vpack.c.b16 %v199, %v198
    %v258 = vpack.c.b16 %v201, %v200
    %v259 = vpack.c.b16 %v203, %v202
    %v260 = vpack.c.b16 %v205, %v204
    %v261 = vpack.c.b16 %v207, %v206
    %v262 = vpack.c.b16 %v209, %v208
    %v263 = vpack.c.b16 %v211, %v210
    %v264 = vpack.c.b16 %v213, %v212
    %v265 = vpack.c.b16 %v215, %v214
    %v266 = vpack.c.b16 %v217, %v216
    %v267 = vpack.c.b16 %v219, %v218
    %v268 = vpack.c.b16 %v221, %v220
    %v269 = vpack.c.b16 %v223, %v222
    %v270 = vpack.c.b16 %v225, %v224
    %v271 = vpack.c.b16 %v227, %v226
    %v272 = vpack.c.b16 %v229, %v228
    %v273 = vpack.c.b16 %v231, %v230
    %v274 = vpack.c.b16 %v233, %v232
    %v275 = vpack.c.b16 %v235, %v234
    %v276 = vpack.c.b16 %v237, %v236
    %v277 = vpack.c.b16 %v239, %v238
    %v278 = vpack.c.b16 %v241, %v240
    %v279 = vpack.c.b16 %v243, %v242
    %v280 = vpack.c.b16 %v245, %v244
    %v281 = vpack.c.b16 %v247, %v246
    %v282 = vpack.c.b16 %v249, %v248
    %v283 = vpack.c.b16 %v251, %v250
    %v332 = vunpack.c.l.b16 %v108
    %v333 = vunpack.c.l.b16 %v109
    %v334 = vunpack.c.l.b16 %v110
    %v335 = vunpack.c.l.b16 %v111
    %v336 = vunpack.c.l.b16 %v112
    %v337 = vunpack.c.l.b16 %v113
    %v338 = vunpack.c.l.b16 %v114
    %v339 = vunpack.c.l.b16 %v115
    %v340 = vunpack.c.l.b16 %v116
    %v341 = vunpack.c.l.b16 %v117
    %v342 = vunpack.c.l.b16 %v118
    %v343 = vunpack.c.l.b16 %v119
    %v344 = vunpack.c.l.b16 %v120
    %v345 = vunpack.c.l.b16 %v121
    %v346 = vunpack.c.l.b16 %v122
    %v347 = vunpack.c.l.b16 %v123
    %v348 = vpack.c.b16 %v333, %v332
    %v349 = vpack.c.b16 %v335, %v334
    %v350 = vpack.c.b16 %v337, %v336
    %v351 = vpack.c.b16 %v339, %v338
    %v352 = vpack.c.b16 %v341, %v340
    %v353 = vpack.c.b16 %v343, %v342
    %v354 = vpack.c.b16 %v345, %v344
    %v355 = vpack.c.b16 %v347, %v346
    %364 = vmatprep.subr.bf16.mxu0 0
    %365 = vmatpush1.bf16.msra.mxu0 %v348
    %366 = vmatprep.subr.bf16.mxu0 0
    %367 = vmatpush1.bf16.msra.mxu0 %v349
    %368 = vmatprep.subr.bf16.mxu0 0
    %369 = vmatpush1.bf16.msra.mxu0 %v350
    %370 = vmatprep.subr.bf16.mxu0 0
    %371 = vmatpush1.bf16.msra.mxu0 %v351
    %372 = vmatprep.subr.bf16.mxu0 0
    %373 = vmatpush1.bf16.msra.mxu0 %v352
    %374 = vmatprep.subr.bf16.mxu0 0
    %375 = vmatpush1.bf16.msra.mxu0 %v353
    %376 = vmatprep.subr.bf16.mxu0 0
    %377 = vmatpush1.bf16.msra.mxu0 %v354
    %378 = vmatprep.subr.bf16.mxu0 0
    %379 = vmatpush1.bf16.msra.mxu0 %v355
    %380 = vmatprep.subr.bf16.mxu0 0
    %381 = vmatpush1.bf16.msra.mxu0 0
    %382 = vmatprep.subr.bf16.mxu0 0
    %383 = vmatpush1.bf16.msra.mxu0 0
    %384 = vmatprep.subr.bf16.mxu0 0
    %385 = vmatpush1.bf16.msra.mxu0 0
    %386 = vmatprep.subr.bf16.mxu0 0
    %387 = vmatpush1.bf16.msra.mxu0 0
    %388 = vmatprep.subr.bf16.mxu0 0
    %389 = vmatpush1.bf16.msra.mxu0 0
    %390 = vmatprep.subr.bf16.mxu0 0
    %391 = vmatpush1.bf16.msra.mxu0 0
    %392 = vmatprep.subr.bf16.mxu0 0
    %393 = vmatpush1.bf16.msra.mxu0 0
    %394 = vmatprep.subr.bf16.mxu0 0
    %395 = vmatpush1.bf16.msra.mxu0 0
    %396 = vmatprep.mubr.bf16.mxu0 0
    %397 = vmatmul.mubr.bf16.gmra.mrb[0].mxu0 %v252
    %v398 = vpop.f32.mrb[0].mxu0
    %v399 = vadd.f32 0.0, %v398
    %v400 = vpop.f32.mrb[0].mxu0
    %v401 = vpop.f32.mrb[0].mxu0
    %v402 = vadd.f32 0.0, %v401
    %v403 = vpop.f32.mrb[0].mxu0
    %404 = vmatprep.mubr.bf16.mxu0 0
    %405 = vmatmul.mubr.bf16.gmra.mrb[0].mxu0 %v253
    %v406 = vpop.f32.mrb[0].mxu0
    %v407 = vadd.f32 0.0, %v406
    %v408 = vpop.f32.mrb[0].mxu0
    %v409 = vpop.f32.mrb[0].mxu0
    %v410 = vadd.f32 0.0, %v409
    %v411 = vpop.f32.mrb[0].mxu0
    %412 = vmatprep.mubr.bf16.mxu0 0
    %413 = vmatmul.mubr.bf16.gmra.mrb[0].mxu0 %v254
    %v414 = vpop.f32.mrb[0].mxu0
    %v415 = vadd.f32 0.0, %v414
    %v416 = vpop.f32.mrb[0].mxu0
    %v417 = vpop.f32.mrb[0].mxu0
    %v418 = vadd.f32 0.0, %v417
    %v419 = vpop.f32.mrb[0].mxu0
    %420 = vmatprep.mubr.bf16.mxu0 0
    %421 = vmatmul.mubr.bf16.gmra.mrb[0].mxu0 %v255
    %v422 = vpop.f32.mrb[0].mxu0
    %v423 = vadd.f32 0.0, %v422
    %v424 = vpop.f32.mrb[0].mxu0
    %v425 = vpop.f32.mrb[0].mxu0
    %v426 = vadd.f32 0.0, %v425
    %v427 = vpop.f32.mrb[0].mxu0
    %428 = vmatprep.mubr.bf16.mxu0 0
    %429 = vmatmul.mubr.bf16.gmra.mrb[0].mxu0 %v256
    %v430 = vpop.f32.mrb[0].mxu0
    %v431 = vadd.f32 0.0, %v430
    %v432 = vpop.f32.mrb[0].mxu0
    %v433 = vpop.f32.mrb[0].mxu0
    %v434 = vadd.f32 0.0, %v433
    %v435 = vpop.f32.mrb[0].mxu0
    %436 = vmatprep.mubr.bf16.mxu0 0
    %437 = vmatmul.mubr.bf16.gmra.mrb[0].mxu0 %v257
    %v438 = vpop.f32.mrb[0].mxu0
    %v439 = vadd.f32 0.0, %v438
    %v440 = vpop.f32.mrb[0].mxu0
    %v441 = vpop.f32.mrb[0].mxu0
    %v442 = vadd.f32 0.0, %v441
    %v443 = vpop.f32.mrb[0].mxu0
    %444 = vmatprep.mubr.bf16.mxu0 0
    %445 = vmatmul.mubr.bf16.gmra.mrb[0].mxu0 %v258
    %v446 = vpop.f32.mrb[0].mxu0
    %v447 = vadd.f32 0.0, %v446
    %v448 = vpop.f32.mrb[0].mxu0
    %v449 = vpop.f32.mrb[0].mxu0
    %v450 = vadd.f32 0.0, %v449
    %v451 = vpop.f32.mrb[0].mxu0
    %452 = vmatprep.mubr.bf16.mxu0 0
    %453 = vmatmul.mubr.bf16.gmra.mrb[0].mxu0 %v259
    %v454 = vpop.f32.mrb[0].mxu0
    %v455 = vadd.f32 0.0, %v454
    %v456 = vpop.f32.mrb[0].mxu0
    %v457 = vpop.f32.mrb[0].mxu0
    %v458 = vadd.f32 0.0, %v457
    %v459 = vpop.f32.mrb[0].mxu0
    %460 = vmatprep.mubr.bf16.mxu0 0
    %461 = vmatmul.mubr.bf16.gmra.mrb[0].mxu0 %v260
    %v462 = vpop.f32.mrb[0].mxu0
    %v463 = vadd.f32 0.0, %v462
    %v464 = vpop.f32.mrb[0].mxu0
    %v465 = vpop.f32.mrb[0].mxu0
    %v466 = vadd.f32 0.0, %v465
    %v467 = vpop.f32.mrb[0].mxu0
    %468 = vmatprep.mubr.bf16.mxu0 0
    %469 = vmatmul.mubr.bf16.gmra.mrb[0].mxu0 %v261
    %v470 = vpop.f32.mrb[0].mxu0
    %v471 = vadd.f32 0.0, %v470
    %v472 = vpop.f32.mrb[0].mxu0
    %v473 = vpop.f32.mrb[0].mxu0
    %v474 = vadd.f32 0.0, %v473
    %v475 = vpop.f32.mrb[0].mxu0
    %476 = vmatprep.mubr.bf16.mxu0 0
    %477 = vmatmul.mubr.bf16.gmra.mrb[0].mxu0 %v262
    %v478 = vpop.f32.mrb[0].mxu0
    %v479 = vadd.f32 0.0, %v478
    %v480 = vpop.f32.mrb[0].mxu0
    %v481 = vpop.f32.mrb[0].mxu0
    %v482 = vadd.f32 0.0, %v481
    %v483 = vpop.f32.mrb[0].mxu0
    %484 = vmatprep.mubr.bf16.mxu0 0
    %485 = vmatmul.mubr.bf16.gmra.mrb[0].mxu0 %v263
    %v486 = vpop.f32.mrb[0].mxu0
    %v487 = vadd.f32 0.0, %v486
    %v488 = vpop.f32.mrb[0].mxu0
    %v489 = vpop.f32.mrb[0].mxu0
    %v490 = vadd.f32 0.0, %v489
    %v491 = vpop.f32.mrb[0].mxu0
    %492 = vmatprep.mubr.bf16.mxu0 0
    %493 = vmatmul.mubr.bf16.gmra.mrb[0].mxu0 %v264
    %v494 = vpop.f32.mrb[0].mxu0
    %v495 = vadd.f32 0.0, %v494
    %v496 = vpop.f32.mrb[0].mxu0
    %v497 = vpop.f32.mrb[0].mxu0
    %v498 = vadd.f32 0.0, %v497
    %v499 = vpop.f32.mrb[0].mxu0
    %500 = vmatprep.mubr.bf16.mxu0 0
    %501 = vmatmul.mubr.bf16.gmra.mrb[0].mxu0 %v265
    %v502 = vpop.f32.mrb[0].mxu0
    %v503 = vadd.f32 0.0, %v502
    %v504 = vpop.f32.mrb[0].mxu0
    %v505 = vpop.f32.mrb[0].mxu0
    %v506 = vadd.f32 0.0, %v505
    %v507 = vpop.f32.mrb[0].mxu0
    %508 = vmatprep.mubr.bf16.mxu0 0
    %509 = vmatmul.mubr.bf16.gmra.mrb[0].mxu0 %v266
    %v510 = vpop.f32.mrb[0].mxu0
    %v511 = vadd.f32 0.0, %v510
    %v512 = vpop.f32.mrb[0].mxu0
    %v513 = vpop.f32.mrb[0].mxu0
    %v514 = vadd.f32 0.0, %v513
    %v515 = vpop.f32.mrb[0].mxu0
    %516 = vmatprep.mubr.bf16.mxu0 0
    %517 = vmatmul.mubr.bf16.gmra.mrb[0].mxu0 %v267
    %v518 = vpop.f32.mrb[0].mxu0
    %v519 = vadd.f32 0.0, %v518
    %v520 = vpop.f32.mrb[0].mxu0
    %v521 = vpop.f32.mrb[0].mxu0
    %v522 = vadd.f32 0.0, %v521
    %v523 = vpop.f32.mrb[0].mxu0
    %524 = vmatprep.mubr.bf16.mxu0 0
    %525 = vmatmul.mubr.bf16.gmra.mrb[0].mxu0 %v268
    %v526 = vpop.f32.mrb[0].mxu0
    %v527 = vadd.f32 0.0, %v526
    %v528 = vpop.f32.mrb[0].mxu0
    %v529 = vpop.f32.mrb[0].mxu0
    %v530 = vadd.f32 0.0, %v529
    %v531 = vpop.f32.mrb[0].mxu0
    %532 = vmatprep.mubr.bf16.mxu0 0
    %533 = vmatmul.mubr.bf16.gmra.mrb[0].mxu0 %v269
    %v534 = vpop.f32.mrb[0].mxu0
    %v535 = vadd.f32 0.0, %v534
    %v536 = vpop.f32.mrb[0].mxu0
    %v537 = vpop.f32.mrb[0].mxu0
    %v538 = vadd.f32 0.0, %v537
    %v539 = vpop.f32.mrb[0].mxu0
    %540 = vmatprep.mubr.bf16.mxu0 0
    %541 = vmatmul.mubr.bf16.gmra.mrb[0].mxu0 %v270
    %v542 = vpop.f32.mrb[0].mxu0
    %v543 = vadd.f32 0.0, %v542
    %v544 = vpop.f32.mrb[0].mxu0
    %v545 = vpop.f32.mrb[0].mxu0
    %v546 = vadd.f32 0.0, %v545
    %v547 = vpop.f32.mrb[0].mxu0
    %548 = vmatprep.mubr.bf16.mxu0 0
    %549 = vmatmul.mubr.bf16.gmra.mrb[0].mxu0 %v271
    %v550 = vpop.f32.mrb[0].mxu0
    %v551 = vadd.f32 0.0, %v550
    %v552 = vpop.f32.mrb[0].mxu0
    %v553 = vpop.f32.mrb[0].mxu0
    %v554 = vadd.f32 0.0, %v553
    %v555 = vpop.f32.mrb[0].mxu0
    %556 = vmatprep.mubr.bf16.mxu0 0
    %557 = vmatmul.mubr.bf16.gmra.mrb[0].mxu0 %v272
    %v558 = vpop.f32.mrb[0].mxu0
    %v559 = vadd.f32 0.0, %v558
    %v560 = vpop.f32.mrb[0].mxu0
    %v561 = vpop.f32.mrb[0].mxu0
    %v562 = vadd.f32 0.0, %v561
    %v563 = vpop.f32.mrb[0].mxu0
    %564 = vmatprep.mubr.bf16.mxu0 0
    %565 = vmatmul.mubr.bf16.gmra.mrb[0].mxu0 %v273
    %v566 = vpop.f32.mrb[0].mxu0
    %v567 = vadd.f32 0.0, %v566
    %v568 = vpop.f32.mrb[0].mxu0
    %v569 = vpop.f32.mrb[0].mxu0
    %v570 = vadd.f32 0.0, %v569
    %v571 = vpop.f32.mrb[0].mxu0
    %572 = vmatprep.mubr.bf16.mxu0 0
    %573 = vmatmul.mubr.bf16.gmra.mrb[0].mxu0 %v274
    %v574 = vpop.f32.mrb[0].mxu0
    %v575 = vadd.f32 0.0, %v574
    %v576 = vpop.f32.mrb[0].mxu0
    %v577 = vpop.f32.mrb[0].mxu0
    %v578 = vadd.f32 0.0, %v577
    %v579 = vpop.f32.mrb[0].mxu0
    %580 = vmatprep.mubr.bf16.mxu0 0
    %581 = vmatmul.mubr.bf16.gmra.mrb[0].mxu0 %v275
    %v582 = vpop.f32.mrb[0].mxu0
    %v583 = vadd.f32 0.0, %v582
    %v584 = vpop.f32.mrb[0].mxu0
    %v585 = vpop.f32.mrb[0].mxu0
    %v586 = vadd.f32 0.0, %v585
    %v587 = vpop.f32.mrb[0].mxu0
    %588 = vmatprep.mubr.bf16.mxu0 0
    %589 = vmatmul.mubr.bf16.gmra.mrb[0].mxu0 %v276
    %v590 = vpop.f32.mrb[0].mxu0
    %v591 = vadd.f32 0.0, %v590
    %v592 = vpop.f32.mrb[0].mxu0
    %v593 = vpop.f32.mrb[0].mxu0
    %v594 = vadd.f32 0.0, %v593
    %v595 = vpop.f32.mrb[0].mxu0
    %596 = vmatprep.mubr.bf16.mxu0 0
    %597 = vmatmul.mubr.bf16.gmra.mrb[0].mxu0 %v277
    %v598 = vpop.f32.mrb[0].mxu0
    %v599 = vadd.f32 0.0, %v598
    %v600 = vpop.f32.mrb[0].mxu0
    %v601 = vpop.f32.mrb[0].mxu0
    %v602 = vadd.f32 0.0, %v601
    %v603 = vpop.f32.mrb[0].mxu0
    %604 = vmatprep.mubr.bf16.mxu0 0
    %605 = vmatmul.mubr.bf16.gmra.mrb[0].mxu0 %v278
    %v606 = vpop.f32.mrb[0].mxu0
    %v607 = vadd.f32 0.0, %v606
    %v608 = vpop.f32.mrb[0].mxu0
    %v609 = vpop.f32.mrb[0].mxu0
    %v610 = vadd.f32 0.0, %v609
    %v611 = vpop.f32.mrb[0].mxu0
    %612 = vmatprep.mubr.bf16.mxu0 0
    %613 = vmatmul.mubr.bf16.gmra.mrb[0].mxu0 %v279
    %v614 = vpop.f32.mrb[0].mxu0
    %v615 = vadd.f32 0.0, %v614
    %v616 = vpop.f32.mrb[0].mxu0
    %v617 = vpop.f32.mrb[0].mxu0
    %v618 = vadd.f32 0.0, %v617
    %v619 = vpop.f32.mrb[0].mxu0
    %620 = vmatprep.mubr.bf16.mxu0 0
    %621 = vmatmul.mubr.bf16.gmra.mrb[0].mxu0 %v280
    %v622 = vpop.f32.mrb[0].mxu0
    %v623 = vadd.f32 0.0, %v622
    %v624 = vpop.f32.mrb[0].mxu0
    %v625 = vpop.f32.mrb[0].mxu0
    %v626 = vadd.f32 0.0, %v625
    %v627 = vpop.f32.mrb[0].mxu0
    %628 = vmatprep.mubr.bf16.mxu0 0
    %629 = vmatmul.mubr.bf16.gmra.mrb[0].mxu0 %v281
    %v630 = vpop.f32.mrb[0].mxu0
    %v631 = vadd.f32 0.0, %v630
    %v632 = vpop.f32.mrb[0].mxu0
    %v633 = vpop.f32.mrb[0].mxu0
    %v634 = vadd.f32 0.0, %v633
    %v635 = vpop.f32.mrb[0].mxu0
    %636 = vmatprep.mubr.bf16.mxu0 0
    %637 = vmatmul.mubr.bf16.gmra.mrb[0].mxu0 %v282
    %v638 = vpop.f32.mrb[0].mxu0
    %v639 = vadd.f32 0.0, %v638
    %v640 = vpop.f32.mrb[0].mxu0
    %v641 = vpop.f32.mrb[0].mxu0
    %v642 = vadd.f32 0.0, %v641
    %v643 = vpop.f32.mrb[0].mxu0
    %644 = vmatprep.mubr.bf16.mxu0 0
    %645 = vmatmul.mubr.bf16.gmra.mrb[0].mxu0 %v283
    %v646 = vpop.f32.mrb[0].mxu0
    %v647 = vadd.f32 0.0, %v646
    %v648 = vpop.f32.mrb[0].mxu0
    %v649 = vpop.f32.mrb[0].mxu0
    %v650 = vadd.f32 0.0, %v649
    %v651 = vpop.f32.mrb[0].mxu0
    %652 = vdwg.mxu0
    %v653 = vld [vmem:[%s2] sm:$0x1]
    %v655 = vlaneseq
    %v656 = vshrl.u32 %v655, 7
    %v657 = vsub.s32 0, %v656
    %v658 = vrot.slane %v653, %v657
    %vm660 = vcmp.ge.f32.partialorder %v399, %v658
    %vm661 = vcmp.ge.f32.partialorder %v402, %v658
    %vm662 = vcmp.ge.f32.partialorder %v407, %v658
    %vm663 = vcmp.ge.f32.partialorder %v410, %v658
    %vm664 = vcmp.ge.f32.partialorder %v415, %v658
    %vm665 = vcmp.ge.f32.partialorder %v418, %v658
    %vm666 = vcmp.ge.f32.partialorder %v423, %v658
    %vm667 = vcmp.ge.f32.partialorder %v426, %v658
    %vm668 = vcmp.ge.f32.partialorder %v431, %v658
    %vm669 = vcmp.ge.f32.partialorder %v434, %v658
    %vm670 = vcmp.ge.f32.partialorder %v439, %v658
    %vm671 = vcmp.ge.f32.partialorder %v442, %v658
    %vm672 = vcmp.ge.f32.partialorder %v447, %v658
    %vm673 = vcmp.ge.f32.partialorder %v450, %v658
    %vm674 = vcmp.ge.f32.partialorder %v455, %v658
    %vm675 = vcmp.ge.f32.partialorder %v458, %v658
    %vm676 = vcmp.ge.f32.partialorder %v463, %v658
    %vm677 = vcmp.ge.f32.partialorder %v466, %v658
    %vm678 = vcmp.ge.f32.partialorder %v471, %v658
    %vm679 = vcmp.ge.f32.partialorder %v474, %v658
    %vm680 = vcmp.ge.f32.partialorder %v479, %v658
    %vm681 = vcmp.ge.f32.partialorder %v482, %v658
    %vm682 = vcmp.ge.f32.partialorder %v487, %v658
    %vm683 = vcmp.ge.f32.partialorder %v490, %v658
    %vm684 = vcmp.ge.f32.partialorder %v495, %v658
    %vm685 = vcmp.ge.f32.partialorder %v498, %v658
    %vm686 = vcmp.ge.f32.partialorder %v503, %v658
    %vm687 = vcmp.ge.f32.partialorder %v506, %v658
    %vm688 = vcmp.ge.f32.partialorder %v511, %v658
    %vm689 = vcmp.ge.f32.partialorder %v514, %v658
    %vm690 = vcmp.ge.f32.partialorder %v519, %v658
    %vm691 = vcmp.ge.f32.partialorder %v522, %v658
    %vm692 = vcmp.ge.f32.partialorder %v527, %v658
    %vm693 = vcmp.ge.f32.partialorder %v530, %v658
    %vm694 = vcmp.ge.f32.partialorder %v535, %v658
    %vm695 = vcmp.ge.f32.partialorder %v538, %v658
    %vm696 = vcmp.ge.f32.partialorder %v543, %v658
    %vm697 = vcmp.ge.f32.partialorder %v546, %v658
    %vm698 = vcmp.ge.f32.partialorder %v551, %v658
    %vm699 = vcmp.ge.f32.partialorder %v554, %v658
    %vm700 = vcmp.ge.f32.partialorder %v559, %v658
    %vm701 = vcmp.ge.f32.partialorder %v562, %v658
    %vm702 = vcmp.ge.f32.partialorder %v567, %v658
    %vm703 = vcmp.ge.f32.partialorder %v570, %v658
    %vm704 = vcmp.ge.f32.partialorder %v575, %v658
    %vm705 = vcmp.ge.f32.partialorder %v578, %v658
    %vm706 = vcmp.ge.f32.partialorder %v583, %v658
    %vm707 = vcmp.ge.f32.partialorder %v586, %v658
    %vm708 = vcmp.ge.f32.partialorder %v591, %v658
    %vm709 = vcmp.ge.f32.partialorder %v594, %v658
    %vm710 = vcmp.ge.f32.partialorder %v599, %v658
    %vm711 = vcmp.ge.f32.partialorder %v602, %v658
    %vm712 = vcmp.ge.f32.partialorder %v607, %v658
    %vm713 = vcmp.ge.f32.partialorder %v610, %v658
    %vm714 = vcmp.ge.f32.partialorder %v615, %v658
    %vm715 = vcmp.ge.f32.partialorder %v618, %v658
    %vm716 = vcmp.ge.f32.partialorder %v623, %v658
    %vm717 = vcmp.ge.f32.partialorder %v626, %v658
    %vm718 = vcmp.ge.f32.partialorder %v631, %v658
    %vm719 = vcmp.ge.f32.partialorder %v634, %v658
    %vm720 = vcmp.ge.f32.partialorder %v639, %v658
    %vm721 = vcmp.ge.f32.partialorder %v642, %v658
    %vm722 = vcmp.ge.f32.partialorder %v647, %v658
    %vm723 = vcmp.ge.f32.partialorder %v650, %v658
    %v724 = vsel %vm660, 1, 0
    %v725 = vsel %vm661, 1, 0
    %v726 = vsel %vm662, 1, 0
    %v727 = vsel %vm663, 1, 0
    %v728 = vsel %vm664, 1, 0
    %v729 = vsel %vm665, 1, 0
    %v730 = vsel %vm666, 1, 0
    %v731 = vsel %vm667, 1, 0
    %v732 = vsel %vm668, 1, 0
    %v733 = vsel %vm669, 1, 0
    %v734 = vsel %vm670, 1, 0
    %v735 = vsel %vm671, 1, 0
    %v736 = vsel %vm672, 1, 0
    %v737 = vsel %vm673, 1, 0
    %v738 = vsel %vm674, 1, 0
    %v739 = vsel %vm675, 1, 0
    %v740 = vsel %vm676, 1, 0
    %v741 = vsel %vm677, 1, 0
    %v742 = vsel %vm678, 1, 0
    %v743 = vsel %vm679, 1, 0
    %v744 = vsel %vm680, 1, 0
    %v745 = vsel %vm681, 1, 0
    %v746 = vsel %vm682, 1, 0
    %v747 = vsel %vm683, 1, 0
    %v748 = vsel %vm684, 1, 0
    %v749 = vsel %vm685, 1, 0
    %v750 = vsel %vm686, 1, 0
    %v751 = vsel %vm687, 1, 0
    %v752 = vsel %vm688, 1, 0
    %v753 = vsel %vm689, 1, 0
    %v754 = vsel %vm690, 1, 0
    %v755 = vsel %vm691, 1, 0
    %v756 = vsel %vm692, 1, 0
    %v757 = vsel %vm693, 1, 0
    %v758 = vsel %vm694, 1, 0
    %v759 = vsel %vm695, 1, 0
    %v760 = vsel %vm696, 1, 0
    %v761 = vsel %vm697, 1, 0
    %v762 = vsel %vm698, 1, 0
    %v763 = vsel %vm699, 1, 0
    %v764 = vsel %vm700, 1, 0
    %v765 = vsel %vm701, 1, 0
    %v766 = vsel %vm702, 1, 0
    %v767 = vsel %vm703, 1, 0
    %v768 = vsel %vm704, 1, 0
    %v769 = vsel %vm705, 1, 0
    %v770 = vsel %vm706, 1, 0
    %v771 = vsel %vm707, 1, 0
    %v772 = vsel %vm708, 1, 0
    %v773 = vsel %vm709, 1, 0
    %v774 = vsel %vm710, 1, 0
    %v775 = vsel %vm711, 1, 0
    %v776 = vsel %vm712, 1, 0
    %v777 = vsel %vm713, 1, 0
    %v778 = vsel %vm714, 1, 0
    %v779 = vsel %vm715, 1, 0
    %v780 = vsel %vm716, 1, 0
    %v781 = vsel %vm717, 1, 0
    %v782 = vsel %vm718, 1, 0
    %v783 = vsel %vm719, 1, 0
    %v784 = vsel %vm720, 1, 0
    %v785 = vsel %vm721, 1, 0
    %v786 = vsel %vm722, 1, 0
    %v787 = vsel %vm723, 1, 0
    %v788 = vcvt.s32.f32 %v724
    %v789 = vcvt.s32.f32 %v725
    %v790 = vcvt.s32.f32 %v726
    %v791 = vcvt.s32.f32 %v727
    %v792 = vcvt.s32.f32 %v728
    %v793 = vcvt.s32.f32 %v729
    %v794 = vcvt.s32.f32 %v730
    %v795 = vcvt.s32.f32 %v731
    %v796 = vcvt.s32.f32 %v732
    %v797 = vcvt.s32.f32 %v733
    %v798 = vcvt.s32.f32 %v734
    %v799 = vcvt.s32.f32 %v735
    %v800 = vcvt.s32.f32 %v736
    %v801 = vcvt.s32.f32 %v737
    %v802 = vcvt.s32.f32 %v738
    %v803 = vcvt.s32.f32 %v739
    %v804 = vcvt.s32.f32 %v740
    %v805 = vcvt.s32.f32 %v741
    %v806 = vcvt.s32.f32 %v742
    %v807 = vcvt.s32.f32 %v743
    %v808 = vcvt.s32.f32 %v744
    %v809 = vcvt.s32.f32 %v745
    %v810 = vcvt.s32.f32 %v746
    %v811 = vcvt.s32.f32 %v747
    %v812 = vcvt.s32.f32 %v748
    %v813 = vcvt.s32.f32 %v749
    %v814 = vcvt.s32.f32 %v750
    %v815 = vcvt.s32.f32 %v751
    %v816 = vcvt.s32.f32 %v752
    %v817 = vcvt.s32.f32 %v753
    %v818 = vcvt.s32.f32 %v754
    %v819 = vcvt.s32.f32 %v755
    %v820 = vcvt.s32.f32 %v756
    %v821 = vcvt.s32.f32 %v757
    %v822 = vcvt.s32.f32 %v758
    %v823 = vcvt.s32.f32 %v759
    %v824 = vcvt.s32.f32 %v760
    %v825 = vcvt.s32.f32 %v761
    %v826 = vcvt.s32.f32 %v762
    %v827 = vcvt.s32.f32 %v763
    %v828 = vcvt.s32.f32 %v764
    %v829 = vcvt.s32.f32 %v765
    %v830 = vcvt.s32.f32 %v766
    %v831 = vcvt.s32.f32 %v767
    %v832 = vcvt.s32.f32 %v768
    %v833 = vcvt.s32.f32 %v769
    %v834 = vcvt.s32.f32 %v770
    %v835 = vcvt.s32.f32 %v771
    %v836 = vcvt.s32.f32 %v772
    %v837 = vcvt.s32.f32 %v773
    %v838 = vcvt.s32.f32 %v774
    %v839 = vcvt.s32.f32 %v775
    %v840 = vcvt.s32.f32 %v776
    %v841 = vcvt.s32.f32 %v777
    %v842 = vcvt.s32.f32 %v778
    %v843 = vcvt.s32.f32 %v779
    %v844 = vcvt.s32.f32 %v780
    %v845 = vcvt.s32.f32 %v781
    %v846 = vcvt.s32.f32 %v782
    %v847 = vcvt.s32.f32 %v783
    %v848 = vcvt.s32.f32 %v784
    %v849 = vcvt.s32.f32 %v785
    %v850 = vcvt.s32.f32 %v786
    %v851 = vcvt.s32.f32 %v787
    %v852 = vpack.c.bf16 %v789, %v788
    %v853 = vpack.c.bf16 %v791, %v790
    %v854 = vpack.c.bf16 %v793, %v792
    %v855 = vpack.c.bf16 %v795, %v794
    %v856 = vpack.c.bf16 %v797, %v796
    %v857 = vpack.c.bf16 %v799, %v798
    %v858 = vpack.c.bf16 %v801, %v800
    %v859 = vpack.c.bf16 %v803, %v802
    %v860 = vpack.c.bf16 %v805, %v804
    %v861 = vpack.c.bf16 %v807, %v806
    %v862 = vpack.c.bf16 %v809, %v808
    %v863 = vpack.c.bf16 %v811, %v810
    %v864 = vpack.c.bf16 %v813, %v812
    %v865 = vpack.c.bf16 %v815, %v814
    %v866 = vpack.c.bf16 %v817, %v816
    %v867 = vpack.c.bf16 %v819, %v818
    %v868 = vpack.c.bf16 %v821, %v820
    %v869 = vpack.c.bf16 %v823, %v822
    %v870 = vpack.c.bf16 %v825, %v824
    %v871 = vpack.c.bf16 %v827, %v826
    %v872 = vpack.c.bf16 %v829, %v828
    %v873 = vpack.c.bf16 %v831, %v830
    %v874 = vpack.c.bf16 %v833, %v832
    %v875 = vpack.c.bf16 %v835, %v834
    %v876 = vpack.c.bf16 %v837, %v836
    %v877 = vpack.c.bf16 %v839, %v838
    %v878 = vpack.c.bf16 %v841, %v840
    %v879 = vpack.c.bf16 %v843, %v842
    %v880 = vpack.c.bf16 %v845, %v844
    %v881 = vpack.c.bf16 %v847, %v846
    %v882 = vpack.c.bf16 %v849, %v848
    %v883 = vpack.c.bf16 %v851, %v850
    %v916 = vunpack.c.l.b16 %v852
    %v917 = vunpack.c.h.b16 %v852
    %v918 = vunpack.c.l.b16 %v853
    %v919 = vunpack.c.h.b16 %v853
    %v920 = vunpack.c.l.b16 %v854
    %v921 = vunpack.c.h.b16 %v854
    %v922 = vunpack.c.l.b16 %v855
    %v923 = vunpack.c.h.b16 %v855
    %v924 = vunpack.c.l.b16 %v856
    %v925 = vunpack.c.h.b16 %v856
    %v926 = vunpack.c.l.b16 %v857
    %v927 = vunpack.c.h.b16 %v857
    %v928 = vunpack.c.l.b16 %v858
    %v929 = vunpack.c.h.b16 %v858
    %v930 = vunpack.c.l.b16 %v859
    %v931 = vunpack.c.h.b16 %v859
    %v932 = vunpack.c.l.b16 %v860
    %v933 = vunpack.c.h.b16 %v860
    %v934 = vunpack.c.l.b16 %v861
    %v935 = vunpack.c.h.b16 %v861
    %v936 = vunpack.c.l.b16 %v862
    %v937 = vunpack.c.h.b16 %v862
    %v938 = vunpack.c.l.b16 %v863
    %v939 = vunpack.c.h.b16 %v863
    %v940 = vunpack.c.l.b16 %v864
    %v941 = vunpack.c.h.b16 %v864
    %v942 = vunpack.c.l.b16 %v865
    %v943 = vunpack.c.h.b16 %v865
    %v944 = vunpack.c.l.b16 %v866
    %v945 = vunpack.c.h.b16 %v866
    %v946 = vunpack.c.l.b16 %v867
    %v947 = vunpack.c.h.b16 %v867
    %v948 = vunpack.c.l.b16 %v868
    %v949 = vunpack.c.h.b16 %v868
    %v950 = vunpack.c.l.b16 %v869
    %v951 = vunpack.c.h.b16 %v869
    %v952 = vunpack.c.l.b16 %v870
    %v953 = vunpack.c.h.b16 %v870
    %v954 = vunpack.c.l.b16 %v871
    %v955 = vunpack.c.h.b16 %v871
    %v956 = vunpack.c.l.b16 %v872
    %v957 = vunpack.c.h.b16 %v872
    %v958 = vunpack.c.l.b16 %v873
    %v959 = vunpack.c.h.b16 %v873
    %v960 = vunpack.c.l.b16 %v874
    %v961 = vunpack.c.h.b16 %v874
    %v962 = vunpack.c.l.b16 %v875
    %v963 = vunpack.c.h.b16 %v875
    %v964 = vunpack.c.l.b16 %v876
    %v965 = vunpack.c.h.b16 %v876
    %v966 = vunpack.c.l.b16 %v877
    %v967 = vunpack.c.h.b16 %v877
    %v968 = vunpack.c.l.b16 %v878
    %v969 = vunpack.c.h.b16 %v878
    %v970 = vunpack.c.l.b16 %v879
    %v971 = vunpack.c.h.b16 %v879
    %v972 = vunpack.c.l.b16 %v880
    %v973 = vunpack.c.h.b16 %v880
    %v974 = vunpack.c.l.b16 %v881
    %v975 = vunpack.c.h.b16 %v881
    %v976 = vunpack.c.l.b16 %v882
    %v977 = vunpack.c.h.b16 %v882
    %v978 = vunpack.c.l.b16 %v883
    %v979 = vunpack.c.h.b16 %v883
    %v980 = vpack.c.b16 %v916, %v916
    %v981 = vpack.c.b16 %v917, %v917
    %v982 = vpack.c.b16 %v918, %v918
    %v983 = vpack.c.b16 %v919, %v919
    %v984 = vpack.c.b16 %v920, %v920
    %v985 = vpack.c.b16 %v921, %v921
    %v986 = vpack.c.b16 %v922, %v922
    %v987 = vpack.c.b16 %v923, %v923
    %v988 = vpack.c.b16 %v924, %v924
    %v989 = vpack.c.b16 %v925, %v925
    %v990 = vpack.c.b16 %v926, %v926
    %v991 = vpack.c.b16 %v927, %v927
    %v992 = vpack.c.b16 %v928, %v928
    %v993 = vpack.c.b16 %v929, %v929
    %v994 = vpack.c.b16 %v930, %v930
    %v995 = vpack.c.b16 %v931, %v931
    %v996 = vpack.c.b16 %v932, %v932
    %v997 = vpack.c.b16 %v933, %v933
    %v998 = vpack.c.b16 %v934, %v934
    %v999 = vpack.c.b16 %v935, %v935
    %v1000 = vpack.c.b16 %v936, %v936
    %v1001 = vpack.c.b16 %v937, %v937
    %v1002 = vpack.c.b16 %v938, %v938
    %v1003 = vpack.c.b16 %v939, %v939
    %v1004 = vpack.c.b16 %v940, %v940
    %v1005 = vpack.c.b16 %v941, %v941
    %v1006 = vpack.c.b16 %v942, %v942
    %v1007 = vpack.c.b16 %v943, %v943
    %v1008 = vpack.c.b16 %v944, %v944
    %v1009 = vpack.c.b16 %v945, %v945
    %v1010 = vpack.c.b16 %v946, %v946
    %v1011 = vpack.c.b16 %v947, %v947
    %v1012 = vpack.c.b16 %v948, %v948
    %v1013 = vpack.c.b16 %v949, %v949
    %v1014 = vpack.c.b16 %v950, %v950
    %v1015 = vpack.c.b16 %v951, %v951
    %v1016 = vpack.c.b16 %v952, %v952
    %v1017 = vpack.c.b16 %v953, %v953
    %v1018 = vpack.c.b16 %v954, %v954
    %v1019 = vpack.c.b16 %v955, %v955
    %v1020 = vpack.c.b16 %v956, %v956
    %v1021 = vpack.c.b16 %v957, %v957
    %v1022 = vpack.c.b16 %v958, %v958
    %v1023 = vpack.c.b16 %v959, %v959
    %v1024 = vpack.c.b16 %v960, %v960
    %v1025 = vpack.c.b16 %v961, %v961
    %v1026 = vpack.c.b16 %v962, %v962
    %v1027 = vpack.c.b16 %v963, %v963
    %v1028 = vpack.c.b16 %v964, %v964
    %v1029 = vpack.c.b16 %v965, %v965
    %v1030 = vpack.c.b16 %v966, %v966
    %v1031 = vpack.c.b16 %v967, %v967
    %v1032 = vpack.c.b16 %v968, %v968
    %v1033 = vpack.c.b16 %v969, %v969
    %v1034 = vpack.c.b16 %v970, %v970
    %v1035 = vpack.c.b16 %v971, %v971
    %v1036 = vpack.c.b16 %v972, %v972
    %v1037 = vpack.c.b16 %v973, %v973
    %v1038 = vpack.c.b16 %v974, %v974
    %v1039 = vpack.c.b16 %v975, %v975
    %v1040 = vpack.c.b16 %v976, %v976
    %v1041 = vpack.c.b16 %v977, %v977
    %v1042 = vpack.c.b16 %v978, %v978
    %v1043 = vpack.c.b16 %v979, %v979
    %1108 = vst [vmem:[#allocation7] sm:$0xf] %v980
    %1109 = vst [vmem:[#allocation7 + $0x4] sm:$0xf] %v981
    %1110 = vst [vmem:[#allocation7 + $0x8] sm:$0xf] %v982
    %1111 = vst [vmem:[#allocation7 + $0xc] sm:$0xf] %v983
    %1112 = vst [vmem:[#allocation7 + $0x10] sm:$0xf] %v984
    %1113 = vst [vmem:[#allocation7 + $0x14] sm:$0xf] %v985
    %1114 = vst [vmem:[#allocation7 + $0x18] sm:$0xf] %v986
    %1115 = vst [vmem:[#allocation7 + $0x1c] sm:$0xf] %v987
    %1116 = vst [vmem:[#allocation7 + $0x20] sm:$0xf] %v988
    %1117 = vst [vmem:[#allocation7 + $0x24] sm:$0xf] %v989
    %1118 = vst [vmem:[#allocation7 + $0x28] sm:$0xf] %v990
    %1119 = vst [vmem:[#allocation7 + $0x2c] sm:$0xf] %v991
    %1120 = vst [vmem:[#allocation7 + $0x30] sm:$0xf] %v992
    %1121 = vst [vmem:[#allocation7 + $0x34] sm:$0xf] %v993
    %1122 = vst [vmem:[#allocation7 + $0x38] sm:$0xf] %v994
    %1123 = vst [vmem:[#allocation7 + $0x3c] sm:$0xf] %v995
    %1124 = vst [vmem:[#allocation7 + $0x40] sm:$0xf] %v996
    %1125 = vst [vmem:[#allocation7 + $0x44] sm:$0xf] %v997
    %1126 = vst [vmem:[#allocation7 + $0x48] sm:$0xf] %v998
    %1127 = vst [vmem:[#allocation7 + $0x4c] sm:$0xf] %v999
    %1128 = vst [vmem:[#allocation7 + $0x50] sm:$0xf] %v1000
    %1129 = vst [vmem:[#allocation7 + $0x54] sm:$0xf] %v1001
    %1130 = vst [vmem:[#allocation7 + $0x58] sm:$0xf] %v1002
    %1131 = vst [vmem:[#allocation7 + $0x5c] sm:$0xf] %v1003
    %1132 = vst [vmem:[#allocation7 + $0x60] sm:$0xf] %v1004
    %1133 = vst [vmem:[#allocation7 + $0x64] sm:$0xf] %v1005
    %1134 = vst [vmem:[#allocation7 + $0x68] sm:$0xf] %v1006
    %1135 = vst [vmem:[#allocation7 + $0x6c] sm:$0xf] %v1007
    %1136 = vst [vmem:[#allocation7 + $0x70] sm:$0xf] %v1008
    %1137 = vst [vmem:[#allocation7 + $0x74] sm:$0xf] %v1009
    %1138 = vst [vmem:[#allocation7 + $0x78] sm:$0xf] %v1010
    %1139 = vst [vmem:[#allocation7 + $0x7c] sm:$0xf] %v1011
    %1140 = vst [vmem:[#allocation7 + $0x80] sm:$0xf] %v1012
    %1141 = vst [vmem:[#allocation7 + $0x84] sm:$0xf] %v1013
    %1142 = vst [vmem:[#allocation7 + $0x88] sm:$0xf] %v1014
    %1143 = vst [vmem:[#allocation7 + $0x8c] sm:$0xf] %v1015
    %1144 = vst [vmem:[#allocation7 + $0x90] sm:$0xf] %v1016
    %1145 = vst [vmem:[#allocation7 + $0x94] sm:$0xf] %v1017
    %1146 = vst [vmem:[#allocation7 + $0x98] sm:$0xf] %v1018
    %1147 = vst [vmem:[#allocation7 + $0x9c] sm:$0xf] %v1019
    %1148 = vst [vmem:[#allocation7 + $0xa0] sm:$0xf] %v1020
    %1149 = vst [vmem:[#allocation7 + $0xa4] sm:$0xf] %v1021
    %1150 = vst [vmem:[#allocation7 + $0xa8] sm:$0xf] %v1022
    %1151 = vst [vmem:[#allocation7 + $0xac] sm:$0xf] %v1023
    %1152 = vst [vmem:[#allocation7 + $0xb0] sm:$0xf] %v1024
    %1153 = vst [vmem:[#allocation7 + $0xb4] sm:$0xf] %v1025
    %1154 = vst [vmem:[#allocation7 + $0xb8] sm:$0xf] %v1026
    %1155 = vst [vmem:[#allocation7 + $0xbc] sm:$0xf] %v1027
    %1156 = vst [vmem:[#allocation7 + $0xc0] sm:$0xf] %v1028
    %1157 = vst [vmem:[#allocation7 + $0xc4] sm:$0xf] %v1029
    %1158 = vst [vmem:[#allocation7 + $0xc8] sm:$0xf] %v1030
    %1159 = vst [vmem:[#allocation7 + $0xcc] sm:$0xf] %v1031
    %1160 = vst [vmem:[#allocation7 + $0xd0] sm:$0xf] %v1032
    %1161 = vst [vmem:[#allocation7 + $0xd4] sm:$0xf] %v1033
    %1162 = vst [vmem:[#allocation7 + $0xd8] sm:$0xf] %v1034
    %1163 = vst [vmem:[#allocation7 + $0xdc] sm:$0xf] %v1035
    %1164 = vst [vmem:[#allocation7 + $0xe0] sm:$0xf] %v1036
    %1165 = vst [vmem:[#allocation7 + $0xe4] sm:$0xf] %v1037
    %1166 = vst [vmem:[#allocation7 + $0xe8] sm:$0xf] %v1038
    %1167 = vst [vmem:[#allocation7 + $0xec] sm:$0xf] %v1039
    %1168 = vst [vmem:[#allocation7 + $0xf0] sm:$0xf] %v1040
    %1169 = vst [vmem:[#allocation7 + $0xf4] sm:$0xf] %v1041
    %1170 = vst [vmem:[#allocation7 + $0xf8] sm:$0xf] %v1042
    %1171 = vst [vmem:[#allocation7 + $0xfc] sm:$0xf] %v1043
    // Predicated region
    $region22: #{tpu_custom_call.1} parent=1 // pred_check
      _
    $region23: #{tpu_custom_call.1} parent=1 // pred_check_branch
      %1173 = sbr.rel (0) target = $region25
    $region24: #{tpu_custom_call.1} parent=1 // pred_region
      %s1175 = ssub.s32 4096, 4096
      %1176 = vsyncadd [#allocation4], %s1175
      %s1177 = sshll.u32 [#allocation7], 4
      %s1178 = int_to_ptr.vmem [resolvable:$true] %s1177
      %1183 = dma.vmem_to_hbm [thread:$0]  %s1178, 4096, %s3, [#allocation4], 64, 64, 4
    $region25: #{tpu_custom_call.1} parent=1 // pred_fallthru
      _
    // Predicated region
    $region26: #{tpu_custom_call.1} parent=1 // pred_check
      _
    $region27: #{tpu_custom_call.1} parent=1 // pred_check_branch
      %1185 = sbr.rel (0) target = $region29
    $region28: #{tpu_custom_call.1} parent=1 // pred_region
      %1186 = dma.done [#allocation4], 4096
    $region29: #{tpu_custom_call.1} parent=1 // pred_fallthru
      _
    %1187 = vsyncpa [#allocation3], 1
    %1188 = vsyncpa [#allocation6], 1
    %1189 = vsyncpa [#allocation4], 1

</llo_original>
